<compile_context>
chip_gen: v5e
topology: v5e:2x2
jax: 0.10.0
libtpu: 0.0.40
codegen_flags: <defaults>
</compile_context>

<pallas_src>
import functools

import jax
import jax.numpy as jnp
from jax.experimental import pallas as pl
from jax.experimental.pallas import tpu as pltpu


def _round_up(n, m):
    return (n + m - 1) // m * m


def _largest_divisor_leq(n, cap):
    cap = max(1, min(n, cap))
    for d in range(cap, 0, -1):
        if n % d == 0:
            return d
    return 1


def _sublane_pack(itemsize):
    # f32 -> 8, bf16/f16 -> 16, int8/fp8 -> 32 (dtype-aware padding).
    return max(8, 32 // max(1, itemsize))


def _vmem_capacity_bytes():
    try:
        info = pltpu.get_tpu_info()
        cap = int(getattr(info, "vmem_capacity_bytes", 0) or 0)
        if cap > 0:
            return cap
    except Exception:
        pass
    return 64 * 1024 * 1024  # conservative default (v7x-sized VMEM)


def _block_bytes(tc, t_ho, w, wo, s, itemsize, pack):
    # One input block + one output block, including sublane/lane padding,
    # double-buffered by the Pallas pipeline.
    in_blk = tc * _round_up(t_ho, pack) * _round_up(s * w, 128) * itemsize
    out_blk = (s * s) * tc * _round_up(t_ho, pack) * _round_up(wo, 128) * itemsize
    return 2 * (in_blk + out_blk)


def _choose_tiles(b, c, ho, w, wo, s, itemsize, pack, budget):
    def fits(tc, t_ho):
        return _block_bytes(tc, t_ho, w, wo, s, itemsize, pack) <= budget

    # t_ho must be a multiple of the dtype's sublane pack (or the full extent)
    # so the (8,128)-style block constraint holds for every dtype.
    t_ho_cands = [ho] + sorted(
        {d for d in range(pack, ho, pack) if ho % d == 0}, reverse=True)

    tc, t_ho = 1, t_ho_cands[-1]
    for cand in t_ho_cands:             # prefer full output-row span (long bursts)
        tcc = c
        while tcc > 1 and not fits(tcc, cand):
            tcc = _largest_divisor_leq(c, tcc - 1)
        if fits(tcc, cand):
            tc, t_ho = tcc, cand
            break

    # Keep >= 2 grid blocks so both TensorCores get work on v7x.
    if b * (c // tc) * (ho // t_ho) < 2 and c > 1:
        tc = _largest_divisor_leq(c, max(1, tc // 2))
    return tc, t_ho


def _contract_kernel(x_ref, o_ref, *, s, w, wo, use_gather):
    # x_ref block: (tc, t_ho, s*w)  -- the s source rows of each output row are
    #                                  one contiguous lane span, so phase `sh`
    #                                  is a contiguous (non-strided) lane slice.
    # o_ref block: (s*s, tc, t_ho, wo)
    tc, t_ho = x_ref.shape[0], x_ref.shape[1]
    for sh in range(s):
        row = x_ref[:, :, pl.ds(sh * w, w)]            # (tc, t_ho, w)
        for sw in range(s):
            if use_gather:
                # Column-phase deinterleave as a lane gather.
                gidx = sw + s * jax.lax.broadcasted_iota(
                    jnp.int32, (tc, t_ho, wo), 2)
                part = jnp.take_along_axis(
                    row, gidx, axis=2,
                    mode=jax.lax.GatherScatterMode.PROMISE_IN_BOUNDS)
            else:
                # Exact gather-free fallback: wo unit-stride column slices +
                # one lane concat.  Always lowers; slower for large wo.
                cols = [row[:, :, sw + j * s: sw + j * s + 1]
                        for j in range(wo)]
                part = jnp.concatenate(cols, axis=2)
            # Direct per-phase store (no jnp.stack): one dense slab per phase.
            o_ref[pl.ds(sh * s + sw, 1)] = part[None]


def contract(x, gain=2):
    b, c, h, w = x.shape
    s = int(gain)
    if s == 1:
        return x
    assert h % s == 0 and w % s == 0, "spatial dims must be divisible by gain"
    ho, wo = h // s, w // s

    itemsize = jnp.dtype(x.dtype).itemsize
    pack = _sublane_pack(itemsize)
    cap = _vmem_capacity_bytes()
    # ~40% of physical VMEM for the double-buffered working set:
    # ~25 MiB on v7x (64 MiB VMEM), ~51 MiB on v5e/v6e (128 MiB VMEM).
    budget = max(8 * 2**20, min(int(0.40 * cap), 56 * 2**20))

    tc, t_ho = _choose_tiles(b, c, ho, w, wo, s, itemsize, pack, budget)
    footprint = _block_bytes(tc, t_ho, w, wo, s, itemsize, pack)
    vmem_limit = min(max(32 * 2**20, int(footprint * 1.25) + (2 << 20)),
                     int(0.80 * cap))
    vmem_limit = int(min(max(vmem_limit, footprint + (1 << 20)), cap))

    grid = (b, c // tc, ho // t_ho)

    # Free row-major view: (b, c, h, w) -> (b, c, ho, s*w).
    xr = x.reshape(b, c, ho, s * w)

    def run(use_gather):
        call = pl.pallas_call(
            functools.partial(_contract_kernel, s=s, w=w, wo=wo,
                              use_gather=use_gather),
            out_shape=jax.ShapeDtypeStruct((b, s * s, c, ho, wo), x.dtype),
            grid=grid,
            in_specs=[
                pl.BlockSpec((None, tc, t_ho, s * w),
                             lambda bi, ci, hi: (bi, ci, hi, 0)),
            ],
            out_specs=pl.BlockSpec((None, s * s, tc, t_ho, wo),
                                   lambda bi, ci, hi: (bi, 0, ci, hi, 0)),
            compiler_params=pltpu.CompilerParams(
                dimension_semantics=("parallel", "parallel", "parallel"),
                vmem_limit_bytes=vmem_limit),
        )
        return jax.block_until_ready(call(xr))

    try:
        out5 = run(use_gather=True)
    except Exception:
        # Toolchain cannot lower the lane gather -> exact gather-free path.
        out5 = run(use_gather=False)

    # Free reshape: (b, s*s, c, ho, wo) -> (b, c*s*s, ho, wo); channel index
    # becomes (sh*s + sw)*c + ci, matching the PyTorch permute + view.
    return out5.reshape(b, s * s * c, ho, wo)


def contract_reference(x, gain=2):
    b, c, h, w = x.shape
    s = gain
    y = x.reshape(b, c, h // s, s, w // s, s)
    y = jnp.transpose(y, (0, 3, 5, 1, 2, 4))
    return y.reshape(b, c * s * s, h // s, w // s)


if __name__ == "__main__":
    key = jax.random.PRNGKey(0)
    x = jax.random.normal(key, (2, 4, 16, 16), dtype=jnp.float32)

    out = contract(x, gain=2)
    out = jax.block_until_ready(out)

    ref = contract_reference(x, gain=2)
    assert out.shape == ref.shape == (2, 16, 8, 8)
    assert jnp.allclose(out, ref)

    print("KERNEL_OK")
</pallas_src>

<mosaic_0001>
module attributes {stable_mosaic.version = 11 : i64} {
  func.func @_contract_kernel(%arg0: i32, %arg1: i32, %arg2: i32, %arg3: memref<1x4x8x32xf32, #tpu.memory_space<vmem>>, %arg4: memref<1x4x4x8x8xf32, #tpu.memory_space<vmem>>) attributes {dimension_semantics = [#tpu.dimension_semantics<parallel>, #tpu.dimension_semantics<parallel>, #tpu.dimension_semantics<parallel>], iteration_bounds = array<i64: 2, 1, 1>, scalar_prefetch = 0 : i64, scratch_operands = 0 : i64, tpu.core_type = #tpu.core_type<tc>, window_params = [{transform_indices = @transform_0, window_bounds = array<i64: 1, 4, 8, 32>}, {transform_indices = @transform_1, window_bounds = array<i64: 1, 4, 4, 8, 8>}]} {
    %c0 = arith.constant 0 : index
    %c0_0 = arith.constant 0 : index
    %c0_1 = arith.constant 0 : index
    %c0_2 = arith.constant 0 : index
    %0 = vector.load %arg3[%c0, %c0_0, %c0_1, %c0_2] : memref<1x4x8x32xf32, #tpu.memory_space<vmem>>, vector<1x4x8x16xf32>
    %1 = vector.shape_cast %0 : vector<1x4x8x16xf32> to vector<4x8x16xf32>
    %2 = tpu.iota {dimensions = array<i32: 2>} : vector<4x8x8xi32>
    %c2_i32 = arith.constant 2 : i32
    %3 = vector.broadcast %c2_i32 : i32 to vector<4x8x8xi32>
    %4 = arith.muli %3, %2 : vector<4x8x8xi32>
    %c0_i32 = arith.constant 0 : i32
    %5 = vector.broadcast %c0_i32 : i32 to vector<4x8x8xi32>
    %6 = arith.addi %5, %4 : vector<4x8x8xi32>
    %c0_i32_3 = arith.constant 0 : i32
    %7 = vector.broadcast %c0_i32_3 : i32 to vector<4x8x8xi32>
    %8 = arith.cmpi slt, %6, %7 : vector<4x8x8xi32>
    %c16_i32 = arith.constant 16 : i32
    %9 = vector.broadcast %c16_i32 : i32 to vector<4x8x8xi32>
    %10 = arith.addi %6, %9 : vector<4x8x8xi32>
    %11 = arith.select %8, %10, %6 : vector<4x8x8xi1>, vector<4x8x8xi32>
    %12 = vector.shape_cast %11 : vector<4x8x8xi32> to vector<4x8x8x1xi32>
    %13 = vector.shape_cast %12 : vector<4x8x8x1xi32> to vector<4x8x8xi32>
    %14 = tpu.dynamic_gather %1[%13] in [2] : vector<4x8x16xf32>, vector<4x8x8xi32> -> vector<4x8x8xf32>
    %15 = vector.shape_cast %14 : vector<4x8x8xf32> to vector<1x4x8x8xf32>
    %c0_4 = arith.constant 0 : index
    %c0_5 = arith.constant 0 : index
    %c0_6 = arith.constant 0 : index
    %c0_7 = arith.constant 0 : index
    %c0_8 = arith.constant 0 : index
    %16 = vector.load %arg4[%c0_4, %c0_5, %c0_6, %c0_7, %c0_8] : memref<1x4x4x8x8xf32, #tpu.memory_space<vmem>>, vector<1x1x4x8x8xf32>
    %17 = vector.shape_cast %16 : vector<1x1x4x8x8xf32> to vector<1x4x8x8xf32>
    %18 = vector.shape_cast %15 : vector<1x4x8x8xf32> to vector<1x1x4x8x8xf32>
    tpu.vector_store %arg4[%c0_4, %c0_5, %c0_6, %c0_7, %c0_8], %18 {strides = array<i32>} : memref<1x4x4x8x8xf32, #tpu.memory_space<vmem>>, vector<1x1x4x8x8xf32>,
    %19 = tpu.iota {dimensions = array<i32: 2>} : vector<4x8x8xi32>
    %c2_i32_9 = arith.constant 2 : i32
    %20 = vector.broadcast %c2_i32_9 : i32 to vector<4x8x8xi32>
    %21 = arith.muli %20, %19 : vector<4x8x8xi32>
    %c1_i32 = arith.constant 1 : i32
    %22 = vector.broadcast %c1_i32 : i32 to vector<4x8x8xi32>
    %23 = arith.addi %22, %21 : vector<4x8x8xi32>
    %c0_i32_10 = arith.constant 0 : i32
    %24 = vector.broadcast %c0_i32_10 : i32 to vector<4x8x8xi32>
    %25 = arith.cmpi slt, %23, %24 : vector<4x8x8xi32>
    %c16_i32_11 = arith.constant 16 : i32
    %26 = vector.broadcast %c16_i32_11 : i32 to vector<4x8x8xi32>
    %27 = arith.addi %23, %26 : vector<4x8x8xi32>
    %28 = arith.select %25, %27, %23 : vector<4x8x8xi1>, vector<4x8x8xi32>
    %29 = vector.shape_cast %28 : vector<4x8x8xi32> to vector<4x8x8x1xi32>
    %30 = vector.shape_cast %29 : vector<4x8x8x1xi32> to vector<4x8x8xi32>
    %31 = tpu.dynamic_gather %1[%30] in [2] : vector<4x8x16xf32>, vector<4x8x8xi32> -> vector<4x8x8xf32>
    %32 = vector.shape_cast %31 : vector<4x8x8xf32> to vector<1x4x8x8xf32>
    %c0_12 = arith.constant 0 : index
    %c1 = arith.constant 1 : index
    %c0_13 = arith.constant 0 : index
    %c0_14 = arith.constant 0 : index
    %c0_15 = arith.constant 0 : index
    %33 = vector.load %arg4[%c0_12, %c1, %c0_13, %c0_14, %c0_15] : memref<1x4x4x8x8xf32, #tpu.memory_space<vmem>>, vector<1x1x4x8x8xf32>
    %34 = vector.shape_cast %33 : vector<1x1x4x8x8xf32> to vector<1x4x8x8xf32>
    %35 = vector.shape_cast %32 : vector<1x4x8x8xf32> to vector<1x1x4x8x8xf32>
    tpu.vector_store %arg4[%c0_12, %c1, %c0_13, %c0_14, %c0_15], %35 {strides = array<i32>} : memref<1x4x4x8x8xf32, #tpu.memory_space<vmem>>, vector<1x1x4x8x8xf32>,
    %c0_16 = arith.constant 0 : index
    %c0_17 = arith.constant 0 : index
    %c0_18 = arith.constant 0 : index
    %c16 = arith.constant 16 : index
    %36 = vector.load %arg3[%c0_16, %c0_17, %c0_18, %c16] : memref<1x4x8x32xf32, #tpu.memory_space<vmem>>, vector<1x4x8x16xf32>
    %37 = vector.shape_cast %36 : vector<1x4x8x16xf32> to vector<4x8x16xf32>
    %38 = tpu.iota {dimensions = array<i32: 2>} : vector<4x8x8xi32>
    %c2_i32_19 = arith.constant 2 : i32
    %39 = vector.broadcast %c2_i32_19 : i32 to vector<4x8x8xi32>
    %40 = arith.muli %39, %38 : vector<4x8x8xi32>
    %c0_i32_20 = arith.constant 0 : i32
    %41 = vector.broadcast %c0_i32_20 : i32 to vector<4x8x8xi32>
    %42 = arith.addi %41, %40 : vector<4x8x8xi32>
    %c0_i32_21 = arith.constant 0 : i32
    %43 = vector.broadcast %c0_i32_21 : i32 to vector<4x8x8xi32>
    %44 = arith.cmpi slt, %42, %43 : vector<4x8x8xi32>
    %c16_i32_22 = arith.constant 16 : i32
    %45 = vector.broadcast %c16_i32_22 : i32 to vector<4x8x8xi32>
    %46 = arith.addi %42, %45 : vector<4x8x8xi32>
    %47 = arith.select %44, %46, %42 : vector<4x8x8xi1>, vector<4x8x8xi32>
    %48 = vector.shape_cast %47 : vector<4x8x8xi32> to vector<4x8x8x1xi32>
    %49 = vector.shape_cast %48 : vector<4x8x8x1xi32> to vector<4x8x8xi32>
    %50 = tpu.dynamic_gather %37[%49] in [2] : vector<4x8x16xf32>, vector<4x8x8xi32> -> vector<4x8x8xf32>
    %51 = vector.shape_cast %50 : vector<4x8x8xf32> to vector<1x4x8x8xf32>
    %c0_23 = arith.constant 0 : index
    %c2 = arith.constant 2 : index
    %c0_24 = arith.constant 0 : index
    %c0_25 = arith.constant 0 : index
    %c0_26 = arith.constant 0 : index
    %52 = vector.load %arg4[%c0_23, %c2, %c0_24, %c0_25, %c0_26] : memref<1x4x4x8x8xf32, #tpu.memory_space<vmem>>, vector<1x1x4x8x8xf32>
    %53 = vector.shape_cast %52 : vector<1x1x4x8x8xf32> to vector<1x4x8x8xf32>
    %54 = vector.shape_cast %51 : vector<1x4x8x8xf32> to vector<1x1x4x8x8xf32>
    tpu.vector_store %arg4[%c0_23, %c2, %c0_24, %c0_25, %c0_26], %54 {strides = array<i32>} : memref<1x4x4x8x8xf32, #tpu.memory_space<vmem>>, vector<1x1x4x8x8xf32>,
    %55 = tpu.iota {dimensions = array<i32: 2>} : vector<4x8x8xi32>
    %c2_i32_27 = arith.constant 2 : i32
    %56 = vector.broadcast %c2_i32_27 : i32 to vector<4x8x8xi32>
    %57 = arith.muli %56, %55 : vector<4x8x8xi32>
    %c1_i32_28 = arith.constant 1 : i32
    %58 = vector.broadcast %c1_i32_28 : i32 to vector<4x8x8xi32>
    %59 = arith.addi %58, %57 : vector<4x8x8xi32>
    %c0_i32_29 = arith.constant 0 : i32
    %60 = vector.broadcast %c0_i32_29 : i32 to vector<4x8x8xi32>
    %61 = arith.cmpi slt, %59, %60 : vector<4x8x8xi32>
    %c16_i32_30 = arith.constant 16 : i32
    %62 = vector.broadcast %c16_i32_30 : i32 to vector<4x8x8xi32>
    %63 = arith.addi %59, %62 : vector<4x8x8xi32>
    %64 = arith.select %61, %63, %59 : vector<4x8x8xi1>, vector<4x8x8xi32>
    %65 = vector.shape_cast %64 : vector<4x8x8xi32> to vector<4x8x8x1xi32>
    %66 = vector.shape_cast %65 : vector<4x8x8x1xi32> to vector<4x8x8xi32>
    %67 = tpu.dynamic_gather %37[%66] in [2] : vector<4x8x16xf32>, vector<4x8x8xi32> -> vector<4x8x8xf32>
    %68 = vector.shape_cast %67 : vector<4x8x8xf32> to vector<1x4x8x8xf32>
    %c0_31 = arith.constant 0 : index
    %c3 = arith.constant 3 : index
    %c0_32 = arith.constant 0 : index
    %c0_33 = arith.constant 0 : index
    %c0_34 = arith.constant 0 : index
    %69 = vector.load %arg4[%c0_31, %c3, %c0_32, %c0_33, %c0_34] : memref<1x4x4x8x8xf32, #tpu.memory_space<vmem>>, vector<1x1x4x8x8xf32>
    %70 = vector.shape_cast %69 : vector<1x1x4x8x8xf32> to vector<1x4x8x8xf32>
    %71 = vector.shape_cast %68 : vector<1x4x8x8xf32> to vector<1x1x4x8x8xf32>
    tpu.vector_store %arg4[%c0_31, %c3, %c0_32, %c0_33, %c0_34], %71 {strides = array<i32>} : memref<1x4x4x8x8xf32, #tpu.memory_space<vmem>>, vector<1x1x4x8x8xf32>,
    return
  }
  func.func @transform_0(%arg0: i32, %arg1: i32, %arg2: i32) -> (i32, i32, i32, i32) {
    %c0_i32 = arith.constant 0 : i32
    %c0_i32_0 = arith.constant 0 : i32
    return %arg0, %arg1, %arg2, %c0_i32 : i32, i32, i32, i32
  }
  func.func @transform_1(%arg0: i32, %arg1: i32, %arg2: i32) -> (i32, i32, i32, i32, i32) {
    %c0_i32 = arith.constant 0 : i32
    %c0_i32_0 = arith.constant 0 : i32
    %c0_i32_1 = arith.constant 0 : i32
    return %arg0, %c0_i32, %arg1, %arg2, %c0_i32_0 : i32, i32, i32, i32, i32
  }
}

module attributes {stable_mosaic.version = 11 : i64} {
  func.func @_contract_kernel(%arg0: i32, %arg1: i32, %arg2: i32, %arg3: memref<1x4x8x32xf32, #tpu.memory_space<vmem>>, %arg4: memref<1x4x4x8x8xf32, #tpu.memory_space<vmem>>) attributes {dimension_semantics = [#tpu.dimension_semantics<parallel>, #tpu.dimension_semantics<parallel>, #tpu.dimension_semantics<parallel>], iteration_bounds = array<i64: 2, 1, 1>, scalar_prefetch = 0 : i64, scratch_operands = 0 : i64, tpu.core_type = #tpu.core_type<tc>, window_params = [{transform_indices = @transform_0, window_bounds = array<i64: 1, 4, 8, 32>}, {transform_indices = @transform_1, window_bounds = array<i64: 1, 4, 4, 8, 8>}]} {
    %c0 = arith.constant 0 : index
    %c0_0 = arith.constant 0 : index
    %c0_1 = arith.constant 0 : index
    %c0_2 = arith.constant 0 : index
    %0 = vector.load %arg3[%c0, %c0_0, %c0_1, %c0_2] : memref<1x4x8x32xf32, #tpu.memory_space<vmem>>, vector<1x4x8x16xf32>
    %1 = vector.shape_cast %0 : vector<1x4x8x16xf32> to vector<4x8x16xf32>
    %2 = vector.extract_strided_slice %1 {offsets = [0, 0, 0], sizes = [4, 8, 1], strides = [1, 1, 1]} : vector<4x8x16xf32> to vector<4x8x1xf32>
    %3 = vector.extract_strided_slice %1 {offsets = [0, 0, 2], sizes = [4, 8, 1], strides = [1, 1, 1]} : vector<4x8x16xf32> to vector<4x8x1xf32>
    %4 = vector.extract_strided_slice %1 {offsets = [0, 0, 4], sizes = [4, 8, 1], strides = [1, 1, 1]} : vector<4x8x16xf32> to vector<4x8x1xf32>
    %5 = vector.extract_strided_slice %1 {offsets = [0, 0, 6], sizes = [4, 8, 1], strides = [1, 1, 1]} : vector<4x8x16xf32> to vector<4x8x1xf32>
    %6 = vector.extract_strided_slice %1 {offsets = [0, 0, 8], sizes = [4, 8, 1], strides = [1, 1, 1]} : vector<4x8x16xf32> to vector<4x8x1xf32>
    %7 = vector.extract_strided_slice %1 {offsets = [0, 0, 10], sizes = [4, 8, 1], strides = [1, 1, 1]} : vector<4x8x16xf32> to vector<4x8x1xf32>
    %8 = vector.extract_strided_slice %1 {offsets = [0, 0, 12], sizes = [4, 8, 1], strides = [1, 1, 1]} : vector<4x8x16xf32> to vector<4x8x1xf32>
    %9 = vector.extract_strided_slice %1 {offsets = [0, 0, 14], sizes = [4, 8, 1], strides = [1, 1, 1]} : vector<4x8x16xf32> to vector<4x8x1xf32>
    %10 = tpu.concatenate %2, %3, %4, %5, %6, %7, %8, %9 in 2 : vector<4x8x1xf32>, vector<4x8x1xf32>, vector<4x8x1xf32>, vector<4x8x1xf32>, vector<4x8x1xf32>, vector<4x8x1xf32>, vector<4x8x1xf32>, vector<4x8x1xf32> -> vector<4x8x8xf32>
    %11 = vector.shape_cast %10 : vector<4x8x8xf32> to vector<1x4x8x8xf32>
    %c0_3 = arith.constant 0 : index
    %c0_4 = arith.constant 0 : index
    %c0_5 = arith.constant 0 : index
    %c0_6 = arith.constant 0 : index
    %c0_7 = arith.constant 0 : index
    %12 = vector.load %arg4[%c0_3, %c0_4, %c0_5, %c0_6, %c0_7] : memref<1x4x4x8x8xf32, #tpu.memory_space<vmem>>, vector<1x1x4x8x8xf32>
    %13 = vector.shape_cast %12 : vector<1x1x4x8x8xf32> to vector<1x4x8x8xf32>
    %14 = vector.shape_cast %11 : vector<1x4x8x8xf32> to vector<1x1x4x8x8xf32>
    tpu.vector_store %arg4[%c0_3, %c0_4, %c0_5, %c0_6, %c0_7], %14 {strides = array<i32>} : memref<1x4x4x8x8xf32, #tpu.memory_space<vmem>>, vector<1x1x4x8x8xf32>,
    %15 = vector.extract_strided_slice %1 {offsets = [0, 0, 1], sizes = [4, 8, 1], strides = [1, 1, 1]} : vector<4x8x16xf32> to vector<4x8x1xf32>
    %16 = vector.extract_strided_slice %1 {offsets = [0, 0, 3], sizes = [4, 8, 1], strides = [1, 1, 1]} : vector<4x8x16xf32> to vector<4x8x1xf32>
    %17 = vector.extract_strided_slice %1 {offsets = [0, 0, 5], sizes = [4, 8, 1], strides = [1, 1, 1]} : vector<4x8x16xf32> to vector<4x8x1xf32>
    %18 = vector.extract_strided_slice %1 {offsets = [0, 0, 7], sizes = [4, 8, 1], strides = [1, 1, 1]} : vector<4x8x16xf32> to vector<4x8x1xf32>
    %19 = vector.extract_strided_slice %1 {offsets = [0, 0, 9], sizes = [4, 8, 1], strides = [1, 1, 1]} : vector<4x8x16xf32> to vector<4x8x1xf32>
    %20 = vector.extract_strided_slice %1 {offsets = [0, 0, 11], sizes = [4, 8, 1], strides = [1, 1, 1]} : vector<4x8x16xf32> to vector<4x8x1xf32>
    %21 = vector.extract_strided_slice %1 {offsets = [0, 0, 13], sizes = [4, 8, 1], strides = [1, 1, 1]} : vector<4x8x16xf32> to vector<4x8x1xf32>
    %22 = vector.extract_strided_slice %1 {offsets = [0, 0, 15], sizes = [4, 8, 1], strides = [1, 1, 1]} : vector<4x8x16xf32> to vector<4x8x1xf32>
    %23 = tpu.concatenate %15, %16, %17, %18, %19, %20, %21, %22 in 2 : vector<4x8x1xf32>, vector<4x8x1xf32>, vector<4x8x1xf32>, vector<4x8x1xf32>, vector<4x8x1xf32>, vector<4x8x1xf32>, vector<4x8x1xf32>, vector<4x8x1xf32> -> vector<4x8x8xf32>
    %24 = vector.shape_cast %23 : vector<4x8x8xf32> to vector<1x4x8x8xf32>
    %c0_8 = arith.constant 0 : index
    %c1 = arith.constant 1 : index
    %c0_9 = arith.constant 0 : index
    %c0_10 = arith.constant 0 : index
    %c0_11 = arith.constant 0 : index
    %25 = vector.load %arg4[%c0_8, %c1, %c0_9, %c0_10, %c0_11] : memref<1x4x4x8x8xf32, #tpu.memory_space<vmem>>, vector<1x1x4x8x8xf32>
    %26 = vector.shape_cast %25 : vector<1x1x4x8x8xf32> to vector<1x4x8x8xf32>
    %27 = vector.shape_cast %24 : vector<1x4x8x8xf32> to vector<1x1x4x8x8xf32>
    tpu.vector_store %arg4[%c0_8, %c1, %c0_9, %c0_10, %c0_11], %27 {strides = array<i32>} : memref<1x4x4x8x8xf32, #tpu.memory_space<vmem>>, vector<1x1x4x8x8xf32>,
    %c0_12 = arith.constant 0 : index
    %c0_13 = arith.constant 0 : index
    %c0_14 = arith.constant 0 : index
    %c16 = arith.constant 16 : index
    %28 = vector.load %arg3[%c0_12, %c0_13, %c0_14, %c16] : memref<1x4x8x32xf32, #tpu.memory_space<vmem>>, vector<1x4x8x16xf32>
    %29 = vector.shape_cast %28 : vector<1x4x8x16xf32> to vector<4x8x16xf32>
    %30 = vector.extract_strided_slice %29 {offsets = [0, 0, 0], sizes = [4, 8, 1], strides = [1, 1, 1]} : vector<4x8x16xf32> to vector<4x8x1xf32>
    %31 = vector.extract_strided_slice %29 {offsets = [0, 0, 2], sizes = [4, 8, 1], strides = [1, 1, 1]} : vector<4x8x16xf32> to vector<4x8x1xf32>
    %32 = vector.extract_strided_slice %29 {offsets = [0, 0, 4], sizes = [4, 8, 1], strides = [1, 1, 1]} : vector<4x8x16xf32> to vector<4x8x1xf32>
    %33 = vector.extract_strided_slice %29 {offsets = [0, 0, 6], sizes = [4, 8, 1], strides = [1, 1, 1]} : vector<4x8x16xf32> to vector<4x8x1xf32>
    %34 = vector.extract_strided_slice %29 {offsets = [0, 0, 8], sizes = [4, 8, 1], strides = [1, 1, 1]} : vector<4x8x16xf32> to vector<4x8x1xf32>
    %35 = vector.extract_strided_slice %29 {offsets = [0, 0, 10], sizes = [4, 8, 1], strides = [1, 1, 1]} : vector<4x8x16xf32> to vector<4x8x1xf32>
    %36 = vector.extract_strided_slice %29 {offsets = [0, 0, 12], sizes = [4, 8, 1], strides = [1, 1, 1]} : vector<4x8x16xf32> to vector<4x8x1xf32>
    %37 = vector.extract_strided_slice %29 {offsets = [0, 0, 14], sizes = [4, 8, 1], strides = [1, 1, 1]} : vector<4x8x16xf32> to vector<4x8x1xf32>
    %38 = tpu.concatenate %30, %31, %32, %33, %34, %35, %36, %37 in 2 : vector<4x8x1xf32>, vector<4x8x1xf32>, vector<4x8x1xf32>, vector<4x8x1xf32>, vector<4x8x1xf32>, vector<4x8x1xf32>, vector<4x8x1xf32>, vector<4x8x1xf32> -> vector<4x8x8xf32>
    %39 = vector.shape_cast %38 : vector<4x8x8xf32> to vector<1x4x8x8xf32>
    %c0_15 = arith.constant 0 : index
    %c2 = arith.constant 2 : index
    %c0_16 = arith.constant 0 : index
    %c0_17 = arith.constant 0 : index
    %c0_18 = arith.constant 0 : index
    %40 = vector.load %arg4[%c0_15, %c2, %c0_16, %c0_17, %c0_18] : memref<1x4x4x8x8xf32, #tpu.memory_space<vmem>>, vector<1x1x4x8x8xf32>
    %41 = vector.shape_cast %40 : vector<1x1x4x8x8xf32> to vector<1x4x8x8xf32>
    %42 = vector.shape_cast %39 : vector<1x4x8x8xf32> to vector<1x1x4x8x8xf32>
    tpu.vector_store %arg4[%c0_15, %c2, %c0_16, %c0_17, %c0_18], %42 {strides = array<i32>} : memref<1x4x4x8x8xf32, #tpu.memory_space<vmem>>, vector<1x1x4x8x8xf32>,
    %43 = vector.extract_strided_slice %29 {offsets = [0, 0, 1], sizes = [4, 8, 1], strides = [1, 1, 1]} : vector<4x8x16xf32> to vector<4x8x1xf32>
    %44 = vector.extract_strided_slice %29 {offsets = [0, 0, 3], sizes = [4, 8, 1], strides = [1, 1, 1]} : vector<4x8x16xf32> to vector<4x8x1xf32>
    %45 = vector.extract_strided_slice %29 {offsets = [0, 0, 5], sizes = [4, 8, 1], strides = [1, 1, 1]} : vector<4x8x16xf32> to vector<4x8x1xf32>
    %46 = vector.extract_strided_slice %29 {offsets = [0, 0, 7], sizes = [4, 8, 1], strides = [1, 1, 1]} : vector<4x8x16xf32> to vector<4x8x1xf32>
    %47 = vector.extract_strided_slice %29 {offsets = [0, 0, 9], sizes = [4, 8, 1], strides = [1, 1, 1]} : vector<4x8x16xf32> to vector<4x8x1xf32>
    %48 = vector.extract_strided_slice %29 {offsets = [0, 0, 11], sizes = [4, 8, 1], strides = [1, 1, 1]} : vector<4x8x16xf32> to vector<4x8x1xf32>
    %49 = vector.extract_strided_slice %29 {offsets = [0, 0, 13], sizes = [4, 8, 1], strides = [1, 1, 1]} : vector<4x8x16xf32> to vector<4x8x1xf32>
    %50 = vector.extract_strided_slice %29 {offsets = [0, 0, 15], sizes = [4, 8, 1], strides = [1, 1, 1]} : vector<4x8x16xf32> to vector<4x8x1xf32>
    %51 = tpu.concatenate %43, %44, %45, %46, %47, %48, %49, %50 in 2 : vector<4x8x1xf32>, vector<4x8x1xf32>, vector<4x8x1xf32>, vector<4x8x1xf32>, vector<4x8x1xf32>, vector<4x8x1xf32>, vector<4x8x1xf32>, vector<4x8x1xf32> -> vector<4x8x8xf32>
    %52 = vector.shape_cast %51 : vector<4x8x8xf32> to vector<1x4x8x8xf32>
    %c0_19 = arith.constant 0 : index
    %c3 = arith.constant 3 : index
    %c0_20 = arith.constant 0 : index
    %c0_21 = arith.constant 0 : index
    %c0_22 = arith.constant 0 : index
    %53 = vector.load %arg4[%c0_19, %c3, %c0_20, %c0_21, %c0_22] : memref<1x4x4x8x8xf32, #tpu.memory_space<vmem>>, vector<1x1x4x8x8xf32>
    %54 = vector.shape_cast %53 : vector<1x1x4x8x8xf32> to vector<1x4x8x8xf32>
    %55 = vector.shape_cast %52 : vector<1x4x8x8xf32> to vector<1x1x4x8x8xf32>
    tpu.vector_store %arg4[%c0_19, %c3, %c0_20, %c0_21, %c0_22], %55 {strides = array<i32>} : memref<1x4x4x8x8xf32, #tpu.memory_space<vmem>>, vector<1x1x4x8x8xf32>,
    return
  }
  func.func @transform_0(%arg0: i32, %arg1: i32, %arg2: i32) -> (i32, i32, i32, i32) {
    %c0_i32 = arith.constant 0 : i32
    %c0_i32_0 = arith.constant 0 : i32
    return %arg0, %arg1, %arg2, %c0_i32 : i32, i32, i32, i32
  }
  func.func @transform_1(%arg0: i32, %arg1: i32, %arg2: i32) -> (i32, i32, i32, i32, i32) {
    %c0_i32 = arith.constant 0 : i32
    %c0_i32_0 = arith.constant 0 : i32
    %c0_i32_1 = arith.constant 0 : i32
    return %arg0, %c0_i32, %arg1, %arg2, %c0_i32_0 : i32, i32, i32, i32, i32
  }
}

</mosaic_0001>

<llo_original>
// kernel: tpu_custom_call.1
$region0: #{tpu_custom_call.1}
  #allocation0 [shape = 'u32[]', space=smem, size = 0x4, offset = 0x4, fixed_abs, tag = 'smem constant byte address 0x4 - core index']
  #allocation1 [shape = 'u32[72,128]{1,0:T(1,128)}', space=vmem, size = 0x9000, scoped, tag = 'internal scratch']
  %s0 = inlined_call_operand.hbm [shape: f32[2,4,8,32], index: 0, kind: input, shape index: {}]
  %s1 = inlined_call_operand.hbm [shape: f32[2,4,4,8,8], index: 1, kind: output, shape index: {}]
  %s2 = sld [smem:[#allocation0]]
  $region41: #{tpu_custom_call.1} parent=0
    _
  %s4 = ssub.s32 1, %s2
  %s5 = scalar_select 0, %s4, %s2
  $region1: #{tpu_custom_call.1} parent=0
    #allocation2 [shape = 'u8[32768]{0}', space=vmem, size = 0x8000, scoped, tag = 'input window, operand 0']
    #allocation3 [shape = 's32[2]{0}', space=sflag, size = 0x8, scoped, tag = 'scoped memory for tpu_custom_call.1']
    #allocation4 [shape = 's32[2]{0}', space=sflag, size = 0x8, scoped, tag = 'scoped memory for tpu_custom_call.1']
    #allocation5 [shape = 'u8[131072]{0}', space=vmem, size = 0x20000, scoped, tag = 'output window, operand 0']
    %6 = vsyncpa [#allocation3], 0
    %s7 = scalar_lea.sflag [#allocation3], 1
    %8 = vsyncpa %s7, 0
    %9 = vsyncpa [#allocation4], 0
    %s10 = scalar_lea.sflag [#allocation4], 1
    %11 = vsyncpa %s10, 0
    loop: start=0, step=1, limit=4
    $region2: #{tpu_custom_call.1} parent=1 // loop_pre_header
      _
    $region3: #{tpu_custom_call.1} parent=1 // loop_header
      %s13 = sphi 0, %s17
      %p14 = scmp.ge.s32.totalorder %s13, 4
      %s20 = sphi 0, %s39
      %s21 = sphi 0, %s35
      %s22 = sphi 0, %s31
      %s23 = sphi 0, %s20
      %s24 = sphi 0, %s21
      %s25 = sphi 0, %s22
      %s26 = sphi 0, %s23
      %s27 = sphi 0, %s24
      %s28 = sphi 0, %s25
      %s46 = sphi 0, %s48
      %s49 = sphi 0, %s46
      %s50 = sphi 0, %s49
      %s66 = sphi 0, %s50
      %s76 = sphi 0, %s78
      %s79 = sphi 0, %s76
      %s80 = sphi 0, %s79
      %s96 = sphi 0, %s80
    $region4: #{tpu_custom_call.1} parent=1 // loop_header_branch
      %16 = sbr.rel (%p14) target = $region8
    $region5: #{tpu_custom_call.1} parent=1 // loop_body
      %s18 = ssub.s32 %s13, 1
      %s19 = ssub.s32 %s13, 2
      %s29 = sadd.s32 1, %s22
      %p30 = scmp.ge.s32.totalorder %s29, 1
      %s31 = scalar_select %p30, 0, %s29
      %s32 = sadd.s32 1, %s21
      %s33 = scalar_select %p30, %s32, %s21
      %p34 = scmp.ge.s32.totalorder %s33, 1
      %s35 = scalar_select %p34, 0, %s33
      %s36 = sadd.s32 1, %s20
      %s37 = scalar_select %p34, %s36, %s20
      %p38 = scmp.ge.s32.totalorder %s37, 2
      %s39 = scalar_select %p38, 0, %s37
      %s40 = ssub.s32 %s20, %s39
      %s41 = ssub.s32 %s21, %s35
      %s42 = sor.u32 %s40, %s41
      %s43 = ssub.s32 %s22, %s31
      %s44 = sor.u32 %s42, %s43
      %p45 = scmp.eq.s32.totalorder %s44, 0
      %s47 = sadd.s32 %s46, 1
      %s48 = scalar_select %p45, %s46, %s47
      %p51 = pneg %p45
      %p52 = scmp.eq.s32.totalorder %s13, 1
      %p53 = por %p51, %p52
      %p54 = scmp.ne.s32.totalorder %s46, %s49
      %p55 = scmp.eq.s32.totalorder %s13, 0
      %p56 = por %p54, %p55
      %p57 = scmp.ne.s32.totalorder %s46, %s49
      %p58 = scmp.eq.s32.totalorder %s18, 1
      %p59 = por %p57, %p58
      %p60 = scmp.ne.s32.totalorder %s49, %s50
      %p61 = scmp.eq.s32.totalorder %s18, 0
      %p62 = por %p60, %p61
      %p63 = scmp.ne.s32.totalorder %s49, %s50
      %p64 = scmp.eq.s32.totalorder %s19, 1
      %p65 = por %p63, %p64
      %p67 = scmp.ne.s32.totalorder %s50, %s66
      %p68 = scmp.eq.s32.totalorder %s19, 0
      %p69 = por %p67, %p68
      %s70 = ssub.s32 %s20, %s39
      %s71 = ssub.s32 %s21, %s35
      %s72 = sor.u32 %s70, %s71
      %s73 = ssub.s32 %s22, %s31
      %s74 = sor.u32 %s72, %s73
      %p75 = scmp.eq.s32.totalorder %s74, 0
      %s77 = sadd.s32 %s76, 1
      %s78 = scalar_select %p75, %s76, %s77
      %p81 = pneg %p75
      %p82 = scmp.eq.s32.totalorder %s13, 1
      %p83 = por %p81, %p82
      %p84 = scmp.ne.s32.totalorder %s76, %s79
      %p85 = scmp.eq.s32.totalorder %s13, 0
      %p86 = por %p84, %p85
      %p87 = scmp.ne.s32.totalorder %s76, %s79
      %p88 = scmp.eq.s32.totalorder %s18, 1
      %p89 = por %p87, %p88
      %p90 = scmp.ne.s32.totalorder %s79, %s80
      %p91 = scmp.eq.s32.totalorder %s18, 0
      %p92 = por %p90, %p91
      %p93 = scmp.ne.s32.totalorder %s79, %s80
      %p94 = scmp.eq.s32.totalorder %s19, 1
      %p95 = por %p93, %p94
      %p97 = scmp.ne.s32.totalorder %s80, %s96
      %p98 = scmp.eq.s32.totalorder %s19, 0
      %p99 = por %p97, %p98
      %p100 = scmp.le.s32.totalorder 1, %s13
      %p101 = scmp.lt.s32.totalorder %s13, 3
      %p102 = pnand %p100, %p101
      %p103 = pneg %p102
      // Predicated region
      $region9: #{tpu_custom_call.1} parent=5 // pred_check
        _
      $region10: #{tpu_custom_call.1} parent=5 // pred_check_branch
        %105 = sbr.rel (%p102) target = $region12
      $region11: #{tpu_custom_call.1} parent=5 // pred_region
        %s106 = ssub.s32 %s13, 1
      $region12: #{tpu_custom_call.1} parent=5 // pred_fallthru
        _
      %p107 = scmp.lt.s32.totalorder %s13, 2
      // Predicated region
      $region13: #{tpu_custom_call.1} parent=5 // pred_check
        %p108 = pneg %p107
      $region14: #{tpu_custom_call.1} parent=5 // pred_check_branch
        %110 = sbr.rel (%p108) target = $region16
      $region15: #{tpu_custom_call.1} parent=5 // pred_region
        // Predicated region
        $region17: #{tpu_custom_call.1} parent=15 // pred_check
          %p111 = pneg %p56
        $region18: #{tpu_custom_call.1} parent=15 // pred_check_branch
          %113 = sbr.rel (%p111) target = $region20
        $region19: #{tpu_custom_call.1} parent=15 // pred_region
          %s114 = sand.u32 %s46, 1
          %s115 = scalar_lea.sflag [#allocation3], %s114
          %s116 = sand.u32 %s46, 1
          %s117 = smul.addr %s116, 32
          %s118 = scalar_lea.vmem [#allocation2], %s117
          %s119 = smul.u32 4, %s21
          %121 = vsyncadd %s115, 0
          %s122 = sadd.s32 %s22, %s119
          %s123 = smul.addr %s20, 4
          %s124 = sadd.s32 %s122, %s123
          %s125 = smul.addr %s124, 8
          %s126 = scalar_lea.hbm %s0, %s125
          %s127 = sshll.u32 %s126, 4
          %s128 = int_to_ptr.hbm [resolvable:$true] %s127
          %s129 = sshll.u32 %s118, 4
          %s130 = int_to_ptr.vmem [resolvable:$true] %s129
          %135 = dma.hbm_to_vmem [thread:$0]  %s128, 512, %s130, %s115, 128, 128, 8
        $region20: #{tpu_custom_call.1} parent=15 // pred_fallthru
          _
      $region16: #{tpu_custom_call.1} parent=5 // pred_fallthru
        _
      %p136 = scmp.le.s32.totalorder 1, %s13
      %p137 = scmp.lt.s32.totalorder %s13, 3
      %p138 = pnand %p136, %p137
      %p139 = pneg %p138
      // Predicated region
      $region21: #{tpu_custom_call.1} parent=5 // pred_check
        _
      $region22: #{tpu_custom_call.1} parent=5 // pred_check_branch
        %141 = sbr.rel (%p138) target = $region24
      $region23: #{tpu_custom_call.1} parent=5 // pred_region
        %s142 = ssub.s32 %s13, 1
        %s143 = sand.u32 %s49, 1
        %s144 = scalar_lea.sflag [#allocation3], %s143
        %s145 = sand.u32 %s49, 1
        %s146 = smul.addr %s145, 32
        %s147 = scalar_lea.vmem [#allocation2], %s146
        // Predicated region
        $region25: #{tpu_custom_call.1} parent=23 // pred_check
          %p148 = pneg %p62
        $region26: #{tpu_custom_call.1} parent=23 // pred_check_branch
          %150 = sbr.rel (%p148) target = $region28
        $region27: #{tpu_custom_call.1} parent=23 // pred_region
          %152 = dma.done %s144, 512
        $region28: #{tpu_custom_call.1} parent=23 // pred_fallthru
          _
        %s153 = sand.u32 %s49, 1
        %s154 = scalar_lea.sflag [#allocation3], %s153
        %s155 = sand.u32 %s49, 1
        %s156 = smul.addr %s155, 32
        %s157 = scalar_lea.vmem [#allocation2], %s156
        %p158 = pneg %p62
        %p159 = pneg %p59
        %p160 = pneg %p92
        %p161 = pneg %p89
        %s162 = sand.u32 %s79, 1
        %s163 = scalar_lea.sflag [#allocation4], %s162
        %s164 = sand.u32 %s79, 1
        %s165 = smul.addr %s164, 128
        %s166 = scalar_lea.vmem [#allocation5], %s165
        %s167 = smul.u32 4, %s24
        %s168 = smul.u32 4, %s24
        %v169 = vld [vmem:[%s147] sm:$0xff]
        %v170 = vld [vmem:[%s147 + $0x8] sm:$0xff]
        %v171 = vld [vmem:[%s147 + $0x10] sm:$0xff]
        %v172 = vld [vmem:[%s147 + $0x18] sm:$0xff]
        %v173 = vlaneseq
        %v174 = vand.u32 %v173, 127
        %v175 = vmul.u32 %v174, 2
        %vm176 = vcmp.lt.s32.totalorder %v175, 0
        %v177 = vadd.s32 %v175, 16
        %v178 = vsel %vm176, %v177, %v175
        %179 = vset.pattern.permute.xlu0 %v178
        %180 = vperm.xlu0 %179, %v169
        %v181 = vpop.permute.xlu0 %180
        %182 = vset.pattern.permute.xlu0 %v178
        %183 = vperm.xlu0 %182, %v170
        %v184 = vpop.permute.xlu0 %183
        %185 = vset.pattern.permute.xlu0 %v178
        %186 = vperm.xlu0 %185, %v171
        %v187 = vpop.permute.xlu0 %186
        %188 = vset.pattern.permute.xlu0 %v178
        %189 = vperm.xlu0 %188, %v172
        %v190 = vpop.permute.xlu0 %189
        %vm191 = vcmask 64512
        %192 = vst.msk [vmem:[%s166] sm:$0xff] %vm191, %v181
        %193 = vst.msk [vmem:[%s166 + $0x8] sm:$0xff] %vm191, %v184
        %194 = vst.msk [vmem:[%s166 + $0x10] sm:$0xff] %vm191, %v187
        %195 = vst.msk [vmem:[%s166 + $0x18] sm:$0xff] %vm191, %v190
        %v196 = vadd.s32 %v175, 1
        %vm197 = vcmp.lt.s32.totalorder %v196, 0
        %v198 = vadd.s32 %v196, 16
        %v199 = vsel %vm197, %v198, %v196
        %200 = vset.pattern.permute.xlu0 %v199
        %201 = vperm.xlu0 %200, %v169
        %v202 = vpop.permute.xlu0 %201
        %203 = vset.pattern.permute.xlu0 %v199
        %204 = vperm.xlu0 %203, %v170
        %v205 = vpop.permute.xlu0 %204
        %206 = vset.pattern.permute.xlu0 %v199
        %207 = vperm.xlu0 %206, %v171
        %v208 = vpop.permute.xlu0 %207
        %209 = vset.pattern.permute.xlu0 %v199
        %210 = vperm.xlu0 %209, %v172
        %v211 = vpop.permute.xlu0 %210
        %s212 = scalar_lea.vmem %s166, 32 [#allocation5]
        %213 = vst.msk [vmem:[%s212] sm:$0xff] %vm191, %v202
        %214 = vst.msk [vmem:[%s212 + $0x8] sm:$0xff] %vm191, %v205
        %215 = vst.msk [vmem:[%s212 + $0x10] sm:$0xff] %vm191, %v208
        %216 = vst.msk [vmem:[%s212 + $0x18] sm:$0xff] %vm191, %v211
        %v217 = vld [vmem:[%s147] sm:$0xff]
        %v218 = vld [vmem:[%s147 + $0x8] sm:$0xff]
        %v219 = vld [vmem:[%s147 + $0x10] sm:$0xff]
        %v220 = vld [vmem:[%s147 + $0x18] sm:$0xff]
        %225 = vrot.lane.b32.xlu0 %v217, 112
        %v226 = vpop.permute.xlu0 %225
        %227 = vrot.lane.b32.xlu0 %v218, 112
        %v228 = vpop.permute.xlu0 %227
        %229 = vrot.lane.b32.xlu0 %v219, 112
        %v230 = vpop.permute.xlu0 %229
        %231 = vrot.lane.b32.xlu0 %v220, 112
        %v232 = vpop.permute.xlu0 %231
        %237 = vset.pattern.permute.xlu0 %v178
        %238 = vperm.xlu0 %237, %v226
        %v239 = vpop.permute.xlu0 %238
        %240 = vset.pattern.permute.xlu0 %v178
        %241 = vperm.xlu0 %240, %v228
        %v242 = vpop.permute.xlu0 %241
        %243 = vset.pattern.permute.xlu0 %v178
        %244 = vperm.xlu0 %243, %v230
        %v245 = vpop.permute.xlu0 %244
        %246 = vset.pattern.permute.xlu0 %v178
        %247 = vperm.xlu0 %246, %v232
        %v248 = vpop.permute.xlu0 %247
        %s249 = scalar_lea.vmem %s166, 64 [#allocation5]
        %250 = vst.msk [vmem:[%s249] sm:$0xff] %vm191, %v239
        %251 = vst.msk [vmem:[%s249 + $0x8] sm:$0xff] %vm191, %v242
        %252 = vst.msk [vmem:[%s249 + $0x10] sm:$0xff] %vm191, %v245
        %253 = vst.msk [vmem:[%s249 + $0x18] sm:$0xff] %vm191, %v248
        %254 = vset.pattern.permute.xlu0 %v199
        %255 = vperm.xlu0 %254, %v226
        %v256 = vpop.permute.xlu0 %255
        %257 = vset.pattern.permute.xlu0 %v199
        %258 = vperm.xlu0 %257, %v228
        %v259 = vpop.permute.xlu0 %258
        %260 = vset.pattern.permute.xlu0 %v199
        %261 = vperm.xlu0 %260, %v230
        %v262 = vpop.permute.xlu0 %261
        %263 = vset.pattern.permute.xlu0 %v199
        %264 = vperm.xlu0 %263, %v232
        %v265 = vpop.permute.xlu0 %264
        %s266 = scalar_lea.vmem %s166, 96 [#allocation5]
        %267 = vst.msk [vmem:[%s266] sm:$0xff] %vm191, %v256
        %268 = vst.msk [vmem:[%s266 + $0x8] sm:$0xff] %vm191, %v259
        %269 = vst.msk [vmem:[%s266 + $0x10] sm:$0xff] %vm191, %v262
        %270 = vst.msk [vmem:[%s266 + $0x18] sm:$0xff] %vm191, %v265
        %s271 = sand.u32 %s79, 1
        %s272 = scalar_lea.sflag [#allocation4], %s271
        %s273 = sand.u32 %s79, 1
        %s274 = smul.addr %s273, 128
        %s275 = scalar_lea.vmem [#allocation5], %s274
        // Predicated region
        $region29: #{tpu_custom_call.1} parent=23 // pred_check
          %p276 = pneg %p89
        $region30: #{tpu_custom_call.1} parent=23 // pred_check_branch
          %278 = sbr.rel (%p276) target = $region32
        $region31: #{tpu_custom_call.1} parent=23 // pred_region
          %s279 = smul.u32 4, %s24
          %281 = vsyncadd %s272, 0
          %s282 = sadd.s32 %s25, %s279
          %s283 = smul.addr %s23, 16
          %s284 = sadd.s32 %s282, %s283
          %s285 = smul.addr %s284, 8
          %s286 = scalar_lea.hbm %s1, %s285
          %s287 = sshll.u32 %s275, 4
          %s288 = int_to_ptr.vmem [resolvable:$true] %s287
          %s289 = sshll.u32 %s286, 4
          %s290 = int_to_ptr.hbm [resolvable:$true] %s289
          %295 = dma.vmem_to_hbm [thread:$0]  %s288, 2048, %s290, %s272, 128, 128, 8
        $region32: #{tpu_custom_call.1} parent=23 // pred_fallthru
          _
      $region24: #{tpu_custom_call.1} parent=5 // pred_fallthru
        _
      %p296 = scmp.le.s32.totalorder 2, %s13
      // Predicated region
      $region33: #{tpu_custom_call.1} parent=5 // pred_check
        %p297 = pneg %p296
      $region34: #{tpu_custom_call.1} parent=5 // pred_check_branch
        %299 = sbr.rel (%p297) target = $region36
      $region35: #{tpu_custom_call.1} parent=5 // pred_region
        %s300 = ssub.s32 %s13, 2
        // Predicated region
        $region37: #{tpu_custom_call.1} parent=35 // pred_check
          %p301 = pneg %p95
        $region38: #{tpu_custom_call.1} parent=35 // pred_check_branch
          %303 = sbr.rel (%p301) target = $region40
        $region39: #{tpu_custom_call.1} parent=35 // pred_region
          %s304 = sand.u32 %s80, 1
          %s305 = scalar_lea.sflag [#allocation4], %s304
          %s306 = sand.u32 %s80, 1
          %s307 = smul.addr %s306, 128
          %s308 = scalar_lea.vmem [#allocation5], %s307
          %310 = dma.done %s305, 2048
        $region40: #{tpu_custom_call.1} parent=35 // pred_fallthru
          _
      $region36: #{tpu_custom_call.1} parent=5 // pred_fallthru
        _
    $region6: #{tpu_custom_call.1} parent=1 // loop_footer
      %s17 = sadd.s32 1, %s13
    $region7: #{tpu_custom_call.1} parent=1 // loop_footer_branch
      %12 = sbr.rel target = $region3
    $region8: #{tpu_custom_call.1} parent=1 // loop_exit
      _
    %311 = vsyncpa [#allocation3], 1
    %s312 = scalar_lea.sflag [#allocation3], 1
    %313 = vsyncpa %s312, 1
    %314 = vsyncpa [#allocation4], 1
    %s315 = scalar_lea.sflag [#allocation4], 1
    %316 = vsyncpa %s315, 1

// kernel: tpu_custom_call.1
$region0: #{tpu_custom_call.1}
  #allocation0 [shape = 'u32[]', space=smem, size = 0x4, offset = 0x4, fixed_abs, tag = 'smem constant byte address 0x4 - core index']
  #allocation1 [shape = 'u32[72,128]{1,0:T(1,128)}', space=vmem, size = 0x9000, scoped, tag = 'internal scratch']
  %s0 = inlined_call_operand.hbm [shape: f32[2,4,8,32], index: 0, kind: input, shape index: {}]
  %s1 = inlined_call_operand.hbm [shape: f32[2,4,4,8,8], index: 1, kind: output, shape index: {}]
  %s2 = sld [smem:[#allocation0]]
  $region41: #{tpu_custom_call.1} parent=0
    _
  %s4 = ssub.s32 1, %s2
  %s5 = scalar_select 0, %s4, %s2
  $region1: #{tpu_custom_call.1} parent=0
    #allocation2 [shape = 'u8[32768]{0}', space=vmem, size = 0x8000, scoped, tag = 'input window, operand 0']
    #allocation3 [shape = 's32[2]{0}', space=sflag, size = 0x8, scoped, tag = 'scoped memory for tpu_custom_call.1']
    #allocation4 [shape = 's32[2]{0}', space=sflag, size = 0x8, scoped, tag = 'scoped memory for tpu_custom_call.1']
    #allocation5 [shape = 'u8[131072]{0}', space=vmem, size = 0x20000, scoped, tag = 'output window, operand 0']
    %6 = vsyncpa [#allocation3], 0
    %s7 = scalar_lea.sflag [#allocation3], 1
    %8 = vsyncpa %s7, 0
    %9 = vsyncpa [#allocation4], 0
    %s10 = scalar_lea.sflag [#allocation4], 1
    %11 = vsyncpa %s10, 0
    loop: start=0, step=1, limit=4
    $region2: #{tpu_custom_call.1} parent=1 // loop_pre_header
      _
    $region3: #{tpu_custom_call.1} parent=1 // loop_header
      %s13 = sphi 0, %s17
      %p14 = scmp.ge.s32.totalorder %s13, 4
      %s20 = sphi 0, %s39
      %s21 = sphi 0, %s35
      %s22 = sphi 0, %s31
      %s23 = sphi 0, %s20
      %s24 = sphi 0, %s21
      %s25 = sphi 0, %s22
      %s26 = sphi 0, %s23
      %s27 = sphi 0, %s24
      %s28 = sphi 0, %s25
      %s46 = sphi 0, %s48
      %s49 = sphi 0, %s46
      %s50 = sphi 0, %s49
      %s66 = sphi 0, %s50
      %s76 = sphi 0, %s78
      %s79 = sphi 0, %s76
      %s80 = sphi 0, %s79
      %s96 = sphi 0, %s80
    $region4: #{tpu_custom_call.1} parent=1 // loop_header_branch
      %16 = sbr.rel (%p14) target = $region8
    $region5: #{tpu_custom_call.1} parent=1 // loop_body
      %s18 = ssub.s32 %s13, 1
      %s19 = ssub.s32 %s13, 2
      %s29 = sadd.s32 1, %s22
      %p30 = scmp.ge.s32.totalorder %s29, 1
      %s31 = scalar_select %p30, 0, %s29
      %s32 = sadd.s32 1, %s21
      %s33 = scalar_select %p30, %s32, %s21
      %p34 = scmp.ge.s32.totalorder %s33, 1
      %s35 = scalar_select %p34, 0, %s33
      %s36 = sadd.s32 1, %s20
      %s37 = scalar_select %p34, %s36, %s20
      %p38 = scmp.ge.s32.totalorder %s37, 2
      %s39 = scalar_select %p38, 0, %s37
      %s40 = ssub.s32 %s20, %s39
      %s41 = ssub.s32 %s21, %s35
      %s42 = sor.u32 %s40, %s41
      %s43 = ssub.s32 %s22, %s31
      %s44 = sor.u32 %s42, %s43
      %p45 = scmp.eq.s32.totalorder %s44, 0
      %s47 = sadd.s32 %s46, 1
      %s48 = scalar_select %p45, %s46, %s47
      %p51 = pneg %p45
      %p52 = scmp.eq.s32.totalorder %s13, 1
      %p53 = por %p51, %p52
      %p54 = scmp.ne.s32.totalorder %s46, %s49
      %p55 = scmp.eq.s32.totalorder %s13, 0
      %p56 = por %p54, %p55
      %p57 = scmp.ne.s32.totalorder %s46, %s49
      %p58 = scmp.eq.s32.totalorder %s18, 1
      %p59 = por %p57, %p58
      %p60 = scmp.ne.s32.totalorder %s49, %s50
      %p61 = scmp.eq.s32.totalorder %s18, 0
      %p62 = por %p60, %p61
      %p63 = scmp.ne.s32.totalorder %s49, %s50
      %p64 = scmp.eq.s32.totalorder %s19, 1
      %p65 = por %p63, %p64
      %p67 = scmp.ne.s32.totalorder %s50, %s66
      %p68 = scmp.eq.s32.totalorder %s19, 0
      %p69 = por %p67, %p68
      %s70 = ssub.s32 %s20, %s39
      %s71 = ssub.s32 %s21, %s35
      %s72 = sor.u32 %s70, %s71
      %s73 = ssub.s32 %s22, %s31
      %s74 = sor.u32 %s72, %s73
      %p75 = scmp.eq.s32.totalorder %s74, 0
      %s77 = sadd.s32 %s76, 1
      %s78 = scalar_select %p75, %s76, %s77
      %p81 = pneg %p75
      %p82 = scmp.eq.s32.totalorder %s13, 1
      %p83 = por %p81, %p82
      %p84 = scmp.ne.s32.totalorder %s76, %s79
      %p85 = scmp.eq.s32.totalorder %s13, 0
      %p86 = por %p84, %p85
      %p87 = scmp.ne.s32.totalorder %s76, %s79
      %p88 = scmp.eq.s32.totalorder %s18, 1
      %p89 = por %p87, %p88
      %p90 = scmp.ne.s32.totalorder %s79, %s80
      %p91 = scmp.eq.s32.totalorder %s18, 0
      %p92 = por %p90, %p91
      %p93 = scmp.ne.s32.totalorder %s79, %s80
      %p94 = scmp.eq.s32.totalorder %s19, 1
      %p95 = por %p93, %p94
      %p97 = scmp.ne.s32.totalorder %s80, %s96
      %p98 = scmp.eq.s32.totalorder %s19, 0
      %p99 = por %p97, %p98
      %p100 = scmp.le.s32.totalorder 1, %s13
      %p101 = scmp.lt.s32.totalorder %s13, 3
      %p102 = pnand %p100, %p101
      %p103 = pneg %p102
      // Predicated region
      $region9: #{tpu_custom_call.1} parent=5 // pred_check
        _
      $region10: #{tpu_custom_call.1} parent=5 // pred_check_branch
        %105 = sbr.rel (%p102) target = $region12
      $region11: #{tpu_custom_call.1} parent=5 // pred_region
        %s106 = ssub.s32 %s13, 1
      $region12: #{tpu_custom_call.1} parent=5 // pred_fallthru
        _
      %p107 = scmp.lt.s32.totalorder %s13, 2
      // Predicated region
      $region13: #{tpu_custom_call.1} parent=5 // pred_check
        %p108 = pneg %p107
      $region14: #{tpu_custom_call.1} parent=5 // pred_check_branch
        %110 = sbr.rel (%p108) target = $region16
      $region15: #{tpu_custom_call.1} parent=5 // pred_region
        // Predicated region
        $region17: #{tpu_custom_call.1} parent=15 // pred_check
          %p111 = pneg %p56
        $region18: #{tpu_custom_call.1} parent=15 // pred_check_branch
          %113 = sbr.rel (%p111) target = $region20
        $region19: #{tpu_custom_call.1} parent=15 // pred_region
          %s114 = sand.u32 %s46, 1
          %s115 = scalar_lea.sflag [#allocation3], %s114
          %s116 = sand.u32 %s46, 1
          %s117 = smul.addr %s116, 32
          %s118 = scalar_lea.vmem [#allocation2], %s117
          %s119 = smul.u32 4, %s21
          %121 = vsyncadd %s115, 0
          %s122 = sadd.s32 %s22, %s119
          %s123 = smul.addr %s20, 4
          %s124 = sadd.s32 %s122, %s123
          %s125 = smul.addr %s124, 8
          %s126 = scalar_lea.hbm %s0, %s125
          %s127 = sshll.u32 %s126, 4
          %s128 = int_to_ptr.hbm [resolvable:$true] %s127
          %s129 = sshll.u32 %s118, 4
          %s130 = int_to_ptr.vmem [resolvable:$true] %s129
          %135 = dma.hbm_to_vmem [thread:$0]  %s128, 512, %s130, %s115, 128, 128, 8
        $region20: #{tpu_custom_call.1} parent=15 // pred_fallthru
          _
      $region16: #{tpu_custom_call.1} parent=5 // pred_fallthru
        _
      %p136 = scmp.le.s32.totalorder 1, %s13
      %p137 = scmp.lt.s32.totalorder %s13, 3
      %p138 = pnand %p136, %p137
      %p139 = pneg %p138
      // Predicated region
      $region21: #{tpu_custom_call.1} parent=5 // pred_check
        _
      $region22: #{tpu_custom_call.1} parent=5 // pred_check_branch
        %141 = sbr.rel (%p138) target = $region24
      $region23: #{tpu_custom_call.1} parent=5 // pred_region
        %s142 = ssub.s32 %s13, 1
        %s143 = sand.u32 %s49, 1
        %s144 = scalar_lea.sflag [#allocation3], %s143
        %s145 = sand.u32 %s49, 1
        %s146 = smul.addr %s145, 32
        %s147 = scalar_lea.vmem [#allocation2], %s146
        // Predicated region
        $region25: #{tpu_custom_call.1} parent=23 // pred_check
          %p148 = pneg %p62
        $region26: #{tpu_custom_call.1} parent=23 // pred_check_branch
          %150 = sbr.rel (%p148) target = $region28
        $region27: #{tpu_custom_call.1} parent=23 // pred_region
          %152 = dma.done %s144, 512
        $region28: #{tpu_custom_call.1} parent=23 // pred_fallthru
          _
        %s153 = sand.u32 %s49, 1
        %s154 = scalar_lea.sflag [#allocation3], %s153
        %s155 = sand.u32 %s49, 1
        %s156 = smul.addr %s155, 32
        %s157 = scalar_lea.vmem [#allocation2], %s156
        %p158 = pneg %p62
        %p159 = pneg %p59
        %p160 = pneg %p92
        %p161 = pneg %p89
        %s162 = sand.u32 %s79, 1
        %s163 = scalar_lea.sflag [#allocation4], %s162
        %s164 = sand.u32 %s79, 1
        %s165 = smul.addr %s164, 128
        %s166 = scalar_lea.vmem [#allocation5], %s165
        %s167 = smul.u32 4, %s24
        %s168 = smul.u32 4, %s24
        %v169 = vld [vmem:[%s147] sm:$0xff]
        %v170 = vld [vmem:[%s147 + $0x8] sm:$0xff]
        %v171 = vld [vmem:[%s147 + $0x10] sm:$0xff]
        %v172 = vld [vmem:[%s147 + $0x18] sm:$0xff]
        %177 = vrot.lane.b32.xlu0 %v169, 127
        %v178 = vpop.permute.xlu0 %177
        %179 = vrot.lane.b32.xlu0 %v170, 127
        %v180 = vpop.permute.xlu0 %179
        %181 = vrot.lane.b32.xlu0 %v171, 127
        %v182 = vpop.permute.xlu0 %181
        %183 = vrot.lane.b32.xlu0 %v172, 127
        %v184 = vpop.permute.xlu0 %183
        %189 = vrot.lane.b32.xlu0 %v169, 126
        %v190 = vpop.permute.xlu0 %189
        %191 = vrot.lane.b32.xlu0 %v170, 126
        %v192 = vpop.permute.xlu0 %191
        %193 = vrot.lane.b32.xlu0 %v171, 126
        %v194 = vpop.permute.xlu0 %193
        %195 = vrot.lane.b32.xlu0 %v172, 126
        %v196 = vpop.permute.xlu0 %195
        %201 = vrot.lane.b32.xlu0 %v169, 125
        %v202 = vpop.permute.xlu0 %201
        %203 = vrot.lane.b32.xlu0 %v170, 125
        %v204 = vpop.permute.xlu0 %203
        %205 = vrot.lane.b32.xlu0 %v171, 125
        %v206 = vpop.permute.xlu0 %205
        %207 = vrot.lane.b32.xlu0 %v172, 125
        %v208 = vpop.permute.xlu0 %207
        %213 = vrot.lane.b32.xlu0 %v169, 124
        %v214 = vpop.permute.xlu0 %213
        %215 = vrot.lane.b32.xlu0 %v170, 124
        %v216 = vpop.permute.xlu0 %215
        %217 = vrot.lane.b32.xlu0 %v171, 124
        %v218 = vpop.permute.xlu0 %217
        %219 = vrot.lane.b32.xlu0 %v172, 124
        %v220 = vpop.permute.xlu0 %219
        %225 = vrot.lane.b32.xlu0 %v169, 123
        %v226 = vpop.permute.xlu0 %225
        %227 = vrot.lane.b32.xlu0 %v170, 123
        %v228 = vpop.permute.xlu0 %227
        %229 = vrot.lane.b32.xlu0 %v171, 123
        %v230 = vpop.permute.xlu0 %229
        %231 = vrot.lane.b32.xlu0 %v172, 123
        %v232 = vpop.permute.xlu0 %231
        %237 = vrot.lane.b32.xlu0 %v169, 122
        %v238 = vpop.permute.xlu0 %237
        %239 = vrot.lane.b32.xlu0 %v170, 122
        %v240 = vpop.permute.xlu0 %239
        %241 = vrot.lane.b32.xlu0 %v171, 122
        %v242 = vpop.permute.xlu0 %241
        %243 = vrot.lane.b32.xlu0 %v172, 122
        %v244 = vpop.permute.xlu0 %243
        %249 = vrot.lane.b32.xlu0 %v169, 121
        %v250 = vpop.permute.xlu0 %249
        %251 = vrot.lane.b32.xlu0 %v170, 121
        %v252 = vpop.permute.xlu0 %251
        %253 = vrot.lane.b32.xlu0 %v171, 121
        %v254 = vpop.permute.xlu0 %253
        %255 = vrot.lane.b32.xlu0 %v172, 121
        %v256 = vpop.permute.xlu0 %255
        %vm261 = vcmask 7168
        %v262 = vsel %vm261, %v169, %v178
        %v263 = vsel %vm261, %v170, %v180
        %v264 = vsel %vm261, %v171, %v182
        %v265 = vsel %vm261, %v172, %v184
        %vm266 = vcmask 15360
        %v267 = vsel %vm266, %v262, %v190
        %v268 = vsel %vm266, %v263, %v192
        %v269 = vsel %vm266, %v264, %v194
        %v270 = vsel %vm266, %v265, %v196
        %vm271 = vcmask 23552
        %v272 = vsel %vm271, %v267, %v202
        %v273 = vsel %vm271, %v268, %v204
        %v274 = vsel %vm271, %v269, %v206
        %v275 = vsel %vm271, %v270, %v208
        %vm276 = vcmask 31744
        %v277 = vsel %vm276, %v272, %v214
        %v278 = vsel %vm276, %v273, %v216
        %v279 = vsel %vm276, %v274, %v218
        %v280 = vsel %vm276, %v275, %v220
        %vm281 = vcmask 39936
        %v282 = vsel %vm281, %v277, %v226
        %v283 = vsel %vm281, %v278, %v228
        %v284 = vsel %vm281, %v279, %v230
        %v285 = vsel %vm281, %v280, %v232
        %vm286 = vcmask 48128
        %v287 = vsel %vm286, %v282, %v238
        %v288 = vsel %vm286, %v283, %v240
        %v289 = vsel %vm286, %v284, %v242
        %v290 = vsel %vm286, %v285, %v244
        %vm291 = vcmask 56320
        %v292 = vsel %vm291, %v287, %v250
        %v293 = vsel %vm291, %v288, %v252
        %v294 = vsel %vm291, %v289, %v254
        %v295 = vsel %vm291, %v290, %v256
        %vm296 = vcmask 64512
        %297 = vst.msk [vmem:[%s166] sm:$0xff] %vm296, %v292
        %298 = vst.msk [vmem:[%s166 + $0x8] sm:$0xff] %vm296, %v293
        %299 = vst.msk [vmem:[%s166 + $0x10] sm:$0xff] %vm296, %v294
        %300 = vst.msk [vmem:[%s166 + $0x18] sm:$0xff] %vm296, %v295
        %301 = vrot.lane.b32.xlu0 %v169, 120
        %v302 = vpop.permute.xlu0 %301
        %303 = vrot.lane.b32.xlu0 %v170, 120
        %v304 = vpop.permute.xlu0 %303
        %305 = vrot.lane.b32.xlu0 %v171, 120
        %v306 = vpop.permute.xlu0 %305
        %307 = vrot.lane.b32.xlu0 %v172, 120
        %v308 = vpop.permute.xlu0 %307
        %v313 = vsel %vm261, %v178, %v190
        %v314 = vsel %vm261, %v180, %v192
        %v315 = vsel %vm261, %v182, %v194
        %v316 = vsel %vm261, %v184, %v196
        %v317 = vsel %vm266, %v313, %v202
        %v318 = vsel %vm266, %v314, %v204
        %v319 = vsel %vm266, %v315, %v206
        %v320 = vsel %vm266, %v316, %v208
        %v321 = vsel %vm271, %v317, %v214
        %v322 = vsel %vm271, %v318, %v216
        %v323 = vsel %vm271, %v319, %v218
        %v324 = vsel %vm271, %v320, %v220
        %v325 = vsel %vm276, %v321, %v226
        %v326 = vsel %vm276, %v322, %v228
        %v327 = vsel %vm276, %v323, %v230
        %v328 = vsel %vm276, %v324, %v232
        %v329 = vsel %vm281, %v325, %v238
        %v330 = vsel %vm281, %v326, %v240
        %v331 = vsel %vm281, %v327, %v242
        %v332 = vsel %vm281, %v328, %v244
        %v333 = vsel %vm286, %v329, %v250
        %v334 = vsel %vm286, %v330, %v252
        %v335 = vsel %vm286, %v331, %v254
        %v336 = vsel %vm286, %v332, %v256
        %v337 = vsel %vm291, %v333, %v302
        %v338 = vsel %vm291, %v334, %v304
        %v339 = vsel %vm291, %v335, %v306
        %v340 = vsel %vm291, %v336, %v308
        %s341 = scalar_lea.vmem %s166, 32 [#allocation5]
        %342 = vst.msk [vmem:[%s341] sm:$0xff] %vm296, %v337
        %343 = vst.msk [vmem:[%s341 + $0x8] sm:$0xff] %vm296, %v338
        %344 = vst.msk [vmem:[%s341 + $0x10] sm:$0xff] %vm296, %v339
        %345 = vst.msk [vmem:[%s341 + $0x18] sm:$0xff] %vm296, %v340
        %v346 = vld [vmem:[%s147] sm:$0xff]
        %v347 = vld [vmem:[%s147 + $0x8] sm:$0xff]
        %v348 = vld [vmem:[%s147 + $0x10] sm:$0xff]
        %v349 = vld [vmem:[%s147 + $0x18] sm:$0xff]
        %354 = vrot.lane.b32.xlu0 %v346, 112
        %v355 = vpop.permute.xlu0 %354
        %356 = vrot.lane.b32.xlu0 %v347, 112
        %v357 = vpop.permute.xlu0 %356
        %358 = vrot.lane.b32.xlu0 %v348, 112
        %v359 = vpop.permute.xlu0 %358
        %360 = vrot.lane.b32.xlu0 %v349, 112
        %v361 = vpop.permute.xlu0 %360
        %366 = vrot.lane.b32.xlu0 %v346, 111
        %v367 = vpop.permute.xlu0 %366
        %368 = vrot.lane.b32.xlu0 %v347, 111
        %v369 = vpop.permute.xlu0 %368
        %370 = vrot.lane.b32.xlu0 %v348, 111
        %v371 = vpop.permute.xlu0 %370
        %372 = vrot.lane.b32.xlu0 %v349, 111
        %v373 = vpop.permute.xlu0 %372
        %378 = vrot.lane.b32.xlu0 %v346, 110
        %v379 = vpop.permute.xlu0 %378
        %380 = vrot.lane.b32.xlu0 %v347, 110
        %v381 = vpop.permute.xlu0 %380
        %382 = vrot.lane.b32.xlu0 %v348, 110
        %v383 = vpop.permute.xlu0 %382
        %384 = vrot.lane.b32.xlu0 %v349, 110
        %v385 = vpop.permute.xlu0 %384
        %390 = vrot.lane.b32.xlu0 %v346, 109
        %v391 = vpop.permute.xlu0 %390
        %392 = vrot.lane.b32.xlu0 %v347, 109
        %v393 = vpop.permute.xlu0 %392
        %394 = vrot.lane.b32.xlu0 %v348, 109
        %v395 = vpop.permute.xlu0 %394
        %396 = vrot.lane.b32.xlu0 %v349, 109
        %v397 = vpop.permute.xlu0 %396
        %402 = vrot.lane.b32.xlu0 %v346, 108
        %v403 = vpop.permute.xlu0 %402
        %404 = vrot.lane.b32.xlu0 %v347, 108
        %v405 = vpop.permute.xlu0 %404
        %406 = vrot.lane.b32.xlu0 %v348, 108
        %v407 = vpop.permute.xlu0 %406
        %408 = vrot.lane.b32.xlu0 %v349, 108
        %v409 = vpop.permute.xlu0 %408
        %414 = vrot.lane.b32.xlu0 %v346, 107
        %v415 = vpop.permute.xlu0 %414
        %416 = vrot.lane.b32.xlu0 %v347, 107
        %v417 = vpop.permute.xlu0 %416
        %418 = vrot.lane.b32.xlu0 %v348, 107
        %v419 = vpop.permute.xlu0 %418
        %420 = vrot.lane.b32.xlu0 %v349, 107
        %v421 = vpop.permute.xlu0 %420
        %426 = vrot.lane.b32.xlu0 %v346, 106
        %v427 = vpop.permute.xlu0 %426
        %428 = vrot.lane.b32.xlu0 %v347, 106
        %v429 = vpop.permute.xlu0 %428
        %430 = vrot.lane.b32.xlu0 %v348, 106
        %v431 = vpop.permute.xlu0 %430
        %432 = vrot.lane.b32.xlu0 %v349, 106
        %v433 = vpop.permute.xlu0 %432
        %438 = vrot.lane.b32.xlu0 %v346, 105
        %v439 = vpop.permute.xlu0 %438
        %440 = vrot.lane.b32.xlu0 %v347, 105
        %v441 = vpop.permute.xlu0 %440
        %442 = vrot.lane.b32.xlu0 %v348, 105
        %v443 = vpop.permute.xlu0 %442
        %444 = vrot.lane.b32.xlu0 %v349, 105
        %v445 = vpop.permute.xlu0 %444
        %v450 = vsel %vm261, %v355, %v367
        %v451 = vsel %vm261, %v357, %v369
        %v452 = vsel %vm261, %v359, %v371
        %v453 = vsel %vm261, %v361, %v373
        %v454 = vsel %vm266, %v450, %v379
        %v455 = vsel %vm266, %v451, %v381
        %v456 = vsel %vm266, %v452, %v383
        %v457 = vsel %vm266, %v453, %v385
        %v458 = vsel %vm271, %v454, %v391
        %v459 = vsel %vm271, %v455, %v393
        %v460 = vsel %vm271, %v456, %v395
        %v461 = vsel %vm271, %v457, %v397
        %v462 = vsel %vm276, %v458, %v403
        %v463 = vsel %vm276, %v459, %v405
        %v464 = vsel %vm276, %v460, %v407
        %v465 = vsel %vm276, %v461, %v409
        %v466 = vsel %vm281, %v462, %v415
        %v467 = vsel %vm281, %v463, %v417
        %v468 = vsel %vm281, %v464, %v419
        %v469 = vsel %vm281, %v465, %v421
        %v470 = vsel %vm286, %v466, %v427
        %v471 = vsel %vm286, %v467, %v429
        %v472 = vsel %vm286, %v468, %v431
        %v473 = vsel %vm286, %v469, %v433
        %v474 = vsel %vm291, %v470, %v439
        %v475 = vsel %vm291, %v471, %v441
        %v476 = vsel %vm291, %v472, %v443
        %v477 = vsel %vm291, %v473, %v445
        %s478 = scalar_lea.vmem %s166, 64 [#allocation5]
        %479 = vst.msk [vmem:[%s478] sm:$0xff] %vm296, %v474
        %480 = vst.msk [vmem:[%s478 + $0x8] sm:$0xff] %vm296, %v475
        %481 = vst.msk [vmem:[%s478 + $0x10] sm:$0xff] %vm296, %v476
        %482 = vst.msk [vmem:[%s478 + $0x18] sm:$0xff] %vm296, %v477
        %483 = vrot.lane.b32.xlu0 %v346, 104
        %v484 = vpop.permute.xlu0 %483
        %485 = vrot.lane.b32.xlu0 %v347, 104
        %v486 = vpop.permute.xlu0 %485
        %487 = vrot.lane.b32.xlu0 %v348, 104
        %v488 = vpop.permute.xlu0 %487
        %489 = vrot.lane.b32.xlu0 %v349, 104
        %v490 = vpop.permute.xlu0 %489
        %v495 = vsel %vm261, %v367, %v379
        %v496 = vsel %vm261, %v369, %v381
        %v497 = vsel %vm261, %v371, %v383
        %v498 = vsel %vm261, %v373, %v385
        %v499 = vsel %vm266, %v495, %v391
        %v500 = vsel %vm266, %v496, %v393
        %v501 = vsel %vm266, %v497, %v395
        %v502 = vsel %vm266, %v498, %v397
        %v503 = vsel %vm271, %v499, %v403
        %v504 = vsel %vm271, %v500, %v405
        %v505 = vsel %vm271, %v501, %v407
        %v506 = vsel %vm271, %v502, %v409
        %v507 = vsel %vm276, %v503, %v415
        %v508 = vsel %vm276, %v504, %v417
        %v509 = vsel %vm276, %v505, %v419
        %v510 = vsel %vm276, %v506, %v421
        %v511 = vsel %vm281, %v507, %v427
        %v512 = vsel %vm281, %v508, %v429
        %v513 = vsel %vm281, %v509, %v431
        %v514 = vsel %vm281, %v510, %v433
        %v515 = vsel %vm286, %v511, %v439
        %v516 = vsel %vm286, %v512, %v441
        %v517 = vsel %vm286, %v513, %v443
        %v518 = vsel %vm286, %v514, %v445
        %v519 = vsel %vm291, %v515, %v484
        %v520 = vsel %vm291, %v516, %v486
        %v521 = vsel %vm291, %v517, %v488
        %v522 = vsel %vm291, %v518, %v490
        %s523 = scalar_lea.vmem %s166, 96 [#allocation5]
        %524 = vst.msk [vmem:[%s523] sm:$0xff] %vm296, %v519
        %525 = vst.msk [vmem:[%s523 + $0x8] sm:$0xff] %vm296, %v520
        %526 = vst.msk [vmem:[%s523 + $0x10] sm:$0xff] %vm296, %v521
        %527 = vst.msk [vmem:[%s523 + $0x18] sm:$0xff] %vm296, %v522
        %s528 = sand.u32 %s79, 1
        %s529 = scalar_lea.sflag [#allocation4], %s528
        %s530 = sand.u32 %s79, 1
        %s531 = smul.addr %s530, 128
        %s532 = scalar_lea.vmem [#allocation5], %s531
        // Predicated region
        $region29: #{tpu_custom_call.1} parent=23 // pred_check
          %p533 = pneg %p89
        $region30: #{tpu_custom_call.1} parent=23 // pred_check_branch
          %535 = sbr.rel (%p533) target = $region32
        $region31: #{tpu_custom_call.1} parent=23 // pred_region
          %s536 = smul.u32 4, %s24
          %538 = vsyncadd %s529, 0
          %s539 = sadd.s32 %s25, %s536
          %s540 = smul.addr %s23, 16
          %s541 = sadd.s32 %s539, %s540
          %s542 = smul.addr %s541, 8
          %s543 = scalar_lea.hbm %s1, %s542
          %s544 = sshll.u32 %s532, 4
          %s545 = int_to_ptr.vmem [resolvable:$true] %s544
          %s546 = sshll.u32 %s543, 4
          %s547 = int_to_ptr.hbm [resolvable:$true] %s546
          %552 = dma.vmem_to_hbm [thread:$0]  %s545, 2048, %s547, %s529, 128, 128, 8
        $region32: #{tpu_custom_call.1} parent=23 // pred_fallthru
          _
      $region24: #{tpu_custom_call.1} parent=5 // pred_fallthru
        _
      %p553 = scmp.le.s32.totalorder 2, %s13
      // Predicated region
      $region33: #{tpu_custom_call.1} parent=5 // pred_check
        %p554 = pneg %p553
      $region34: #{tpu_custom_call.1} parent=5 // pred_check_branch
        %556 = sbr.rel (%p554) target = $region36
      $region35: #{tpu_custom_call.1} parent=5 // pred_region
        %s557 = ssub.s32 %s13, 2
        // Predicated region
        $region37: #{tpu_custom_call.1} parent=35 // pred_check
          %p558 = pneg %p95
        $region38: #{tpu_custom_call.1} parent=35 // pred_check_branch
          %560 = sbr.rel (%p558) target = $region40
        $region39: #{tpu_custom_call.1} parent=35 // pred_region
          %s561 = sand.u32 %s80, 1
          %s562 = scalar_lea.sflag [#allocation4], %s561
          %s563 = sand.u32 %s80, 1
          %s564 = smul.addr %s563, 128
          %s565 = scalar_lea.vmem [#allocation5], %s564
          %567 = dma.done %s562, 2048
        $region40: #{tpu_custom_call.1} parent=35 // pred_fallthru
          _
      $region36: #{tpu_custom_call.1} parent=5 // pred_fallthru
        _
    $region6: #{tpu_custom_call.1} parent=1 // loop_footer
      %s17 = sadd.s32 1, %s13
    $region7: #{tpu_custom_call.1} parent=1 // loop_footer_branch
      %12 = sbr.rel target = $region3
    $region8: #{tpu_custom_call.1} parent=1 // loop_exit
      _
    %568 = vsyncpa [#allocation3], 1
    %s569 = scalar_lea.sflag [#allocation3], 1
    %570 = vsyncpa %s569, 1
    %571 = vsyncpa [#allocation4], 1
    %s572 = scalar_lea.sflag [#allocation4], 1
    %573 = vsyncpa %s572, 1

</llo_original>
